<compile_context>
chip_gen: v5e
topology: v5e:2x2
jax: 0.10.0
libtpu: 0.0.40
codegen_flags: <defaults>
</compile_context>

<pallas_src>
import jax
import jax.numpy as jnp
from jax import lax
from jax.experimental import pallas as pl
from jax.experimental.pallas import tpu as pltpu


def _round_up(x, m):
    return (x + m - 1) // m * m


def rde_sim_kernel(i_ref, t_ref, out_ref):
    """Compute one (TM, TN) tile of the similarity matrix.

    i_ref  : [TM, Dp] f32 VMEM -- (padded) CLS image features for the rows
    t_ref  : [TN, Dp] f32 VMEM -- (padded) EOT text  features for the cols
    out_ref: [TM, TN] f32 VMEM -- similarity tile
    """

    def l2norm(x):
        # Exactly matches torch l2norm(): x / (sqrt(sum(x^2)) + 1e-8).
        # Zero (padding) rows normalize to 0/1e-8 = 0, so padded sim entries
        # are exactly zero and are sliced off in the wrapper.
        s = jnp.sum(x * x, axis=-1, keepdims=True)
        return x / (jnp.sqrt(s) + 1e-8)

    i_n = l2norm(i_ref[...])
    t_n = l2norm(t_ref[...])

    # TODO(synk): for production batch sizes on v6e/v7x cast i_n/t_n to bf16
    # here (keep preferred_element_type=f32 for f32 accumulation) for 2-4x MXU
    # throughput; kept f32 so the demo matches the f32 reference at 1e-5.
    out_ref[...] = lax.dot_general(
        i_n, t_n,
        dimension_numbers=(((1,), (1,)), ((), ())),   # NT matmul, no transpose
        preferred_element_type=jnp.float32,
    )


def rde_similarity_matrix(image_feats, text_feats, caption_ids):
    """Pallas wrapper: wrapper-side gathers + 2-D parallel tiled sim matmul."""
    B, Li, D = image_feats.shape
    _, Lt, _ = text_feats.shape

    # --- layout plumbing in the wrapper (gathers + padding) -----------------
    # CLS-token row of the image features; EOT-token row of the text features
    # (argmax over token ids, first occurrence, same as torch.argmax).
    i_feats = image_feats[:, 0, :].astype(jnp.float32)
    eot_idx = jnp.argmax(caption_ids, axis=-1)
    t_feats = text_feats[jnp.arange(B), eot_idx].astype(jnp.float32)

    # Pad D to a lane-dense multiple of 128 and the batch to a multiple of the
    # output tile so every load / store is a full (8,128) vreg (unmasked vst).
    Dp = _round_up(D, 128)
    if B >= 256:
        TM = TN = 256          # multiple of 128 -> also v5e-friendly MXU tiles
    else:
        TM = TN = _round_up(B, 128)
    Bp = _round_up(B, TM)

    i_p = jnp.zeros((Bp, Dp), jnp.float32).at[:B, :D].set(i_feats)
    t_p = jnp.zeros((Bp, Dp), jnp.float32).at[:B, :D].set(t_feats)

    grid = (Bp // TM, Bp // TN)

    sim_p = pl.pallas_call(
        rde_sim_kernel,
        out_shape=jax.ShapeDtypeStruct((Bp, Bp), jnp.float32),
        grid_spec=pltpu.PrefetchScalarGridSpec(
            num_scalar_prefetch=0,
            grid=grid,
            in_specs=[
                # Row block of image features for output-tile row i.
                pl.BlockSpec((TM, Dp), lambda i, j: (i, 0)),
                # Row block of text features for output-tile column j.
                pl.BlockSpec((TN, Dp), lambda i, j: (j, 0)),
            ],
            # Bounded, streamed output tiles (no whole-[B,B] resident block).
            out_specs=pl.BlockSpec((TM, TN), lambda i, j: (i, j)),
        ),
        compiler_params=pltpu.CompilerParams(
            # Independent output tiles -> both axes parallel (v7x dual-TC
            # splits them; near-neutral on single-TC v5e/v6e).
            dimension_semantics=("parallel", "parallel"),
        ),
        cost_estimate=pl.CostEstimate(
            flops=2 * Bp * Bp * Dp,
            transcendentals=0,
            bytes_accessed=(2 * Bp * Dp + Bp * Bp) * 4,
        ),
    )(i_p, t_p)

    return sim_p[:B, :B]


def rde_forward(batch, temperature=0.02):
    """Mirrors the pieces of RDE.forward / compute_similarity_matrix computable here."""
    ret = {}
    logit_scale = jnp.ones([], jnp.float32) * (1.0 / temperature)
    ret["temperature"] = 1.0 / logit_scale
    sim = rde_similarity_matrix(
        batch["image_feats"], batch["text_feats"], batch["caption_ids"]
    )
    ret["similarity_matrix"] = sim
    return ret


def _reference(image_feats, text_feats, caption_ids):
    i_feats = image_feats[:, 0, :]
    idx = jnp.argmax(caption_ids, axis=-1)
    t_feats = text_feats[jnp.arange(text_feats.shape[0]), idx]

    def l2n(x):
        return x / (jnp.sqrt(jnp.sum(x * x, -1, keepdims=True)) + 1e-8)

    return l2n(i_feats) @ l2n(t_feats).T


if __name__ == "__main__":
    B, Li, Lt, D = 8, 16, 8, 32
    key = jax.random.PRNGKey(0)
    k1, k2, k3 = jax.random.split(key, 3)

    # Synthetic, deterministic stand-ins for base_model(images, caption_ids) outputs.
    image_feats = jax.random.normal(k1, (B, Li, D), dtype=jnp.float32)
    text_feats = jax.random.normal(k2, (B, Lt, D), dtype=jnp.float32)
    caption_ids = jax.random.randint(k3, (B, Lt), 1, 1000, dtype=jnp.int32)

    batch = {
        "image_feats": image_feats,
        "text_feats": text_feats,
        "caption_ids": caption_ids,
    }

    out = rde_forward(batch)
    sim = jax.block_until_ready(out["similarity_matrix"])

    ref = _reference(image_feats, text_feats, caption_ids)
    assert sim.shape == (B, B)
    assert jnp.allclose(sim, ref, atol=1e-5, rtol=1e-5)

    print("KERNEL_OK")
</pallas_src>

<mosaic_0001>
module attributes {stable_mosaic.version = 11 : i64} {
  func.func @rde_sim_kernel(%arg0: i32, %arg1: i32, %arg2: memref<128x128xf32, #tpu.memory_space<vmem>>, %arg3: memref<128x128xf32, #tpu.memory_space<vmem>>, %arg4: memref<128x128xf32, #tpu.memory_space<vmem>>) attributes {dimension_semantics = [#tpu.dimension_semantics<parallel>, #tpu.dimension_semantics<parallel>], iteration_bounds = array<i64: 1, 1>, scalar_prefetch = 0 : i64, scratch_operands = 0 : i64, tpu.core_type = #tpu.core_type<tc>, window_params = [{transform_indices = @transform_0, window_bounds = array<i64: 128, 128>}, {transform_indices = @transform_1, window_bounds = array<i64: 128, 128>}, {transform_indices = @transform_2, window_bounds = array<i64: 128, 128>}]} {
    %c0 = arith.constant 0 : index
    %c0_0 = arith.constant 0 : index
    %0 = vector.load %arg2[%c0, %c0_0] : memref<128x128xf32, #tpu.memory_space<vmem>>, vector<128x128xf32>
    %1 = arith.mulf %0, %0 : vector<128x128xf32>
    %cst = arith.constant dense<0.000000e+00> : vector<128xf32>
    %2 = vector.multi_reduction <add>, %1, %cst [1] : vector<128x128xf32> to vector<128xf32>
    %3 = vector.shape_cast %2 : vector<128xf32> to vector<128x1xf32>
    %4 = math.sqrt %3 : vector<128x1xf32>
    %cst_1 = arith.constant 9.99999993E-9 : f32
    %5 = vector.broadcast %cst_1 : f32 to vector<128x1xf32>
    %6 = arith.addf %4, %5 : vector<128x1xf32>
    %7 = vector.broadcast %6 : vector<128x1xf32> to vector<128x128xf32>
    %8 = arith.divf %0, %7 : vector<128x128xf32>
    %c0_2 = arith.constant 0 : index
    %c0_3 = arith.constant 0 : index
    %9 = vector.load %arg3[%c0_2, %c0_3] : memref<128x128xf32, #tpu.memory_space<vmem>>, vector<128x128xf32>
    %10 = arith.mulf %9, %9 : vector<128x128xf32>
    %cst_4 = arith.constant dense<0.000000e+00> : vector<128xf32>
    %11 = vector.multi_reduction <add>, %10, %cst_4 [1] : vector<128x128xf32> to vector<128xf32>
    %12 = vector.shape_cast %11 : vector<128xf32> to vector<128x1xf32>
    %13 = math.sqrt %12 : vector<128x1xf32>
    %cst_5 = arith.constant 9.99999993E-9 : f32
    %14 = vector.broadcast %cst_5 : f32 to vector<128x1xf32>
    %15 = arith.addf %13, %14 : vector<128x1xf32>
    %16 = vector.broadcast %15 : vector<128x1xf32> to vector<128x128xf32>
    %17 = arith.divf %9, %16 : vector<128x128xf32>
    %cst_6 = arith.constant dense<0.000000e+00> : vector<128x128xf32>
    %18 = tpu.matmul %8, %17, %cst_6 {dimension_numbers = #tpu.dot_dimension_numbers<[1], [1], [0], [0], [0, 0, 1, 0], [], []>} : vector<128x128xf32>, vector<128x128xf32>, vector<128x128xf32> -> vector<128x128xf32>
    %c0_7 = arith.constant 0 : index
    %c0_8 = arith.constant 0 : index
    %19 = vector.load %arg4[%c0_7, %c0_8] : memref<128x128xf32, #tpu.memory_space<vmem>>, vector<128x128xf32>
    tpu.vector_store %arg4[%c0_7, %c0_8], %18 {strides = array<i32>} : memref<128x128xf32, #tpu.memory_space<vmem>>, vector<128x128xf32>,
    return
  }
  func.func @transform_0(%arg0: i32, %arg1: i32) -> (i32, i32) {
    %c0_i32 = arith.constant 0 : i32
    %c0_i32_0 = arith.constant 0 : i32
    return %arg0, %c0_i32 : i32, i32
  }
  func.func @transform_1(%arg0: i32, %arg1: i32) -> (i32, i32) {
    %c0_i32 = arith.constant 0 : i32
    %c0_i32_0 = arith.constant 0 : i32
    return %arg1, %c0_i32 : i32, i32
  }
  func.func @transform_2(%arg0: i32, %arg1: i32) -> (i32, i32) {
    %c0_i32 = arith.constant 0 : i32
    return %arg0, %arg1 : i32, i32
  }
}

</mosaic_0001>

<llo_original>
// kernel: tpu_custom_call.1
$region0: #{tpu_custom_call.1}
  #allocation0 [shape = 'u32[]', space=smem, size = 0x4, offset = 0x4, fixed_abs, tag = 'smem constant byte address 0x4 - core index']
  #allocation1 [shape = 'u32[72,128]{1,0:T(1,128)}', space=vmem, size = 0x9000, scoped, tag = 'internal scratch']
  %s0 = inlined_call_operand.hbm [shape: f32[128,128], index: 0, kind: input, shape index: {}]
  %s1 = inlined_call_operand.hbm [shape: f32[128,128], index: 1, kind: input, shape index: {}]
  %s2 = inlined_call_operand.hbm [shape: f32[128,128], index: 2, kind: output, shape index: {}]
  %s3 = sld [smem:[#allocation0]]
  $region26: #{tpu_custom_call.1} parent=0
    _
  %s5 = ssub.s32 1, %s3
  %s6 = scalar_select 0, %s5, %s3
  $region1: #{tpu_custom_call.1} parent=0
    #allocation2 [shape = 'u8[65536]{0}', space=vmem, size = 0x10000, scoped, tag = 'input window, operand 0, single buffered']
    #allocation3 [shape = 's32[1]{0}', space=sflag, size = 0x4, scoped, tag = 'scoped memory for tpu_custom_call.1']
    #allocation4 [shape = 's32[1]{0}', space=sflag, size = 0x4, scoped, tag = 'scoped memory for tpu_custom_call.1']
    #allocation5 [shape = 'u8[65536]{0}', space=vmem, size = 0x10000, scoped, tag = 'input window, operand 1, single buffered']
    #allocation6 [shape = 's32[1]{0}', space=sflag, size = 0x4, scoped, tag = 'scoped memory for tpu_custom_call.1']
    #allocation7 [shape = 'u8[65536]{0}', space=vmem, size = 0x10000, scoped, tag = 'output window, operand 0, single buffered']
    %7 = vsyncpa [#allocation3], 0
    %8 = vsyncpa [#allocation6], 0
    %9 = vsyncpa [#allocation4], 0
    // Predicated region
    $region2: #{tpu_custom_call.1} parent=1 // pred_check
      _
    $region3: #{tpu_custom_call.1} parent=1 // pred_check_branch
      %11 = sbr.rel (0) target = $region5
    $region4: #{tpu_custom_call.1} parent=1 // pred_region
      %13 = vsyncadd [#allocation3], 0
      %s14 = sshll.u32 %s0, 4
      %s15 = int_to_ptr.hbm [resolvable:$true] %s14
      %s16 = sshll.u32 [#allocation2], 4
      %s17 = int_to_ptr.vmem [resolvable:$true] %s16
      %22 = dma.hbm_to_vmem [thread:$0]  %s15, 2048, %s17, [#allocation3], 128, 128, 8
    $region5: #{tpu_custom_call.1} parent=1 // pred_fallthru
      _
    // Predicated region
    $region6: #{tpu_custom_call.1} parent=1 // pred_check
      _
    $region7: #{tpu_custom_call.1} parent=1 // pred_check_branch
      %24 = sbr.rel (0) target = $region9
    $region8: #{tpu_custom_call.1} parent=1 // pred_region
      %26 = vsyncadd [#allocation6], 0
      %s27 = sshll.u32 %s1, 4
      %s28 = int_to_ptr.hbm [resolvable:$true] %s27
      %s29 = sshll.u32 [#allocation5], 4
      %s30 = int_to_ptr.vmem [resolvable:$true] %s29
      %35 = dma.hbm_to_vmem [thread:$0]  %s28, 2048, %s30, [#allocation6], 128, 128, 8
    $region9: #{tpu_custom_call.1} parent=1 // pred_fallthru
      _
    // Predicated region
    $region10: #{tpu_custom_call.1} parent=1 // pred_check
      _
    $region11: #{tpu_custom_call.1} parent=1 // pred_check_branch
      %37 = sbr.rel (0) target = $region13
    $region12: #{tpu_custom_call.1} parent=1 // pred_region
      %39 = dma.done [#allocation3], 2048
    $region13: #{tpu_custom_call.1} parent=1 // pred_fallthru
      _
    // Predicated region
    $region14: #{tpu_custom_call.1} parent=1 // pred_check
      _
    $region15: #{tpu_custom_call.1} parent=1 // pred_check_branch
      %41 = sbr.rel (0) target = $region17
    $region16: #{tpu_custom_call.1} parent=1 // pred_region
      %43 = dma.done [#allocation6], 2048
    $region17: #{tpu_custom_call.1} parent=1 // pred_fallthru
      _
    %v44 = vld [vmem:[#allocation2] sm:$0xff]
    %v45 = vld [vmem:[#allocation2 + $0x8] sm:$0xff]
    %v46 = vld [vmem:[#allocation2 + $0x10] sm:$0xff]
    %v47 = vld [vmem:[#allocation2 + $0x18] sm:$0xff]
    %v48 = vld [vmem:[#allocation2 + $0x20] sm:$0xff]
    %v49 = vld [vmem:[#allocation2 + $0x28] sm:$0xff]
    %v50 = vld [vmem:[#allocation2 + $0x30] sm:$0xff]
    %v51 = vld [vmem:[#allocation2 + $0x38] sm:$0xff]
    %v52 = vld [vmem:[#allocation2 + $0x40] sm:$0xff]
    %v53 = vld [vmem:[#allocation2 + $0x48] sm:$0xff]
    %v54 = vld [vmem:[#allocation2 + $0x50] sm:$0xff]
    %v55 = vld [vmem:[#allocation2 + $0x58] sm:$0xff]
    %v56 = vld [vmem:[#allocation2 + $0x60] sm:$0xff]
    %v57 = vld [vmem:[#allocation2 + $0x68] sm:$0xff]
    %v58 = vld [vmem:[#allocation2 + $0x70] sm:$0xff]
    %v59 = vld [vmem:[#allocation2 + $0x78] sm:$0xff]
    %v60 = vmul.f32 %v44, %v44
    %v61 = vmul.f32 %v45, %v45
    %v62 = vmul.f32 %v46, %v46
    %v63 = vmul.f32 %v47, %v47
    %v64 = vmul.f32 %v48, %v48
    %v65 = vmul.f32 %v49, %v49
    %v66 = vmul.f32 %v50, %v50
    %v67 = vmul.f32 %v51, %v51
    %v68 = vmul.f32 %v52, %v52
    %v69 = vmul.f32 %v53, %v53
    %v70 = vmul.f32 %v54, %v54
    %v71 = vmul.f32 %v55, %v55
    %v72 = vmul.f32 %v56, %v56
    %v73 = vmul.f32 %v57, %v57
    %v74 = vmul.f32 %v58, %v58
    %v75 = vmul.f32 %v59, %v59
    %76 = vadd.xlane.f32.xlu0 %v60
    %v77 = vpop.xlane.xlu0 %76
    %78 = vadd.xlane.f32.xlu0 %v61
    %v79 = vpop.xlane.xlu0 %78
    %80 = vadd.xlane.f32.xlu0 %v62
    %v81 = vpop.xlane.xlu0 %80
    %82 = vadd.xlane.f32.xlu0 %v63
    %v83 = vpop.xlane.xlu0 %82
    %84 = vadd.xlane.f32.xlu0 %v64
    %v85 = vpop.xlane.xlu0 %84
    %86 = vadd.xlane.f32.xlu0 %v65
    %v87 = vpop.xlane.xlu0 %86
    %88 = vadd.xlane.f32.xlu0 %v66
    %v89 = vpop.xlane.xlu0 %88
    %90 = vadd.xlane.f32.xlu0 %v67
    %v91 = vpop.xlane.xlu0 %90
    %92 = vadd.xlane.f32.xlu0 %v68
    %v93 = vpop.xlane.xlu0 %92
    %94 = vadd.xlane.f32.xlu0 %v69
    %v95 = vpop.xlane.xlu0 %94
    %96 = vadd.xlane.f32.xlu0 %v70
    %v97 = vpop.xlane.xlu0 %96
    %98 = vadd.xlane.f32.xlu0 %v71
    %v99 = vpop.xlane.xlu0 %98
    %100 = vadd.xlane.f32.xlu0 %v72
    %v101 = vpop.xlane.xlu0 %100
    %102 = vadd.xlane.f32.xlu0 %v73
    %v103 = vpop.xlane.xlu0 %102
    %104 = vadd.xlane.f32.xlu0 %v74
    %v105 = vpop.xlane.xlu0 %104
    %106 = vadd.xlane.f32.xlu0 %v75
    %v107 = vpop.xlane.xlu0 %106
    %v108 = vrsqrt.pop %v77
    %v109 = vmul.f32 %v108, %v77
    %v110 = vmul.f32 %v109, %v108
    %v111 = vmul.f32 0.5, %v110
    %v112 = vsub.f32 1.5, %v111
    %v113 = vmul.f32 %v108, %v112
    %v114 = vmul.f32 %v77, %v113
    %vm115 = vcmp.eq.f32.partialorder %v77, inf
    %v116 = vsel %vm115, %v77, %v114
    %vm117 = vcmp.eq.f32.partialorder %v77, 0.0
    %v118 = vand.u32 %v77, 2147483648
    %v119 = vsel %vm117, %v118, %v116
    %v120 = vrsqrt.pop %v79
    %v121 = vmul.f32 %v120, %v79
    %v122 = vmul.f32 %v121, %v120
    %v123 = vmul.f32 0.5, %v122
    %v124 = vsub.f32 1.5, %v123
    %v125 = vmul.f32 %v120, %v124
    %v126 = vmul.f32 %v79, %v125
    %vm127 = vcmp.eq.f32.partialorder %v79, inf
    %v128 = vsel %vm127, %v79, %v126
    %vm129 = vcmp.eq.f32.partialorder %v79, 0.0
    %v130 = vand.u32 %v79, 2147483648
    %v131 = vsel %vm129, %v130, %v128
    %v132 = vrsqrt.pop %v81
    %v133 = vmul.f32 %v132, %v81
    %v134 = vmul.f32 %v133, %v132
    %v135 = vmul.f32 0.5, %v134
    %v136 = vsub.f32 1.5, %v135
    %v137 = vmul.f32 %v132, %v136
    %v138 = vmul.f32 %v81, %v137
    %vm139 = vcmp.eq.f32.partialorder %v81, inf
    %v140 = vsel %vm139, %v81, %v138
    %vm141 = vcmp.eq.f32.partialorder %v81, 0.0
    %v142 = vand.u32 %v81, 2147483648
    %v143 = vsel %vm141, %v142, %v140
    %v144 = vrsqrt.pop %v83
    %v145 = vmul.f32 %v144, %v83
    %v146 = vmul.f32 %v145, %v144
    %v147 = vmul.f32 0.5, %v146
    %v148 = vsub.f32 1.5, %v147
    %v149 = vmul.f32 %v144, %v148
    %v150 = vmul.f32 %v83, %v149
    %vm151 = vcmp.eq.f32.partialorder %v83, inf
    %v152 = vsel %vm151, %v83, %v150
    %vm153 = vcmp.eq.f32.partialorder %v83, 0.0
    %v154 = vand.u32 %v83, 2147483648
    %v155 = vsel %vm153, %v154, %v152
    %v156 = vrsqrt.pop %v85
    %v157 = vmul.f32 %v156, %v85
    %v158 = vmul.f32 %v157, %v156
    %v159 = vmul.f32 0.5, %v158
    %v160 = vsub.f32 1.5, %v159
    %v161 = vmul.f32 %v156, %v160
    %v162 = vmul.f32 %v85, %v161
    %vm163 = vcmp.eq.f32.partialorder %v85, inf
    %v164 = vsel %vm163, %v85, %v162
    %vm165 = vcmp.eq.f32.partialorder %v85, 0.0
    %v166 = vand.u32 %v85, 2147483648
    %v167 = vsel %vm165, %v166, %v164
    %v168 = vrsqrt.pop %v87
    %v169 = vmul.f32 %v168, %v87
    %v170 = vmul.f32 %v169, %v168
    %v171 = vmul.f32 0.5, %v170
    %v172 = vsub.f32 1.5, %v171
    %v173 = vmul.f32 %v168, %v172
    %v174 = vmul.f32 %v87, %v173
    %vm175 = vcmp.eq.f32.partialorder %v87, inf
    %v176 = vsel %vm175, %v87, %v174
    %vm177 = vcmp.eq.f32.partialorder %v87, 0.0
    %v178 = vand.u32 %v87, 2147483648
    %v179 = vsel %vm177, %v178, %v176
    %v180 = vrsqrt.pop %v89
    %v181 = vmul.f32 %v180, %v89
    %v182 = vmul.f32 %v181, %v180
    %v183 = vmul.f32 0.5, %v182
    %v184 = vsub.f32 1.5, %v183
    %v185 = vmul.f32 %v180, %v184
    %v186 = vmul.f32 %v89, %v185
    %vm187 = vcmp.eq.f32.partialorder %v89, inf
    %v188 = vsel %vm187, %v89, %v186
    %vm189 = vcmp.eq.f32.partialorder %v89, 0.0
    %v190 = vand.u32 %v89, 2147483648
    %v191 = vsel %vm189, %v190, %v188
    %v192 = vrsqrt.pop %v91
    %v193 = vmul.f32 %v192, %v91
    %v194 = vmul.f32 %v193, %v192
    %v195 = vmul.f32 0.5, %v194
    %v196 = vsub.f32 1.5, %v195
    %v197 = vmul.f32 %v192, %v196
    %v198 = vmul.f32 %v91, %v197
    %vm199 = vcmp.eq.f32.partialorder %v91, inf
    %v200 = vsel %vm199, %v91, %v198
    %vm201 = vcmp.eq.f32.partialorder %v91, 0.0
    %v202 = vand.u32 %v91, 2147483648
    %v203 = vsel %vm201, %v202, %v200
    %v204 = vrsqrt.pop %v93
    %v205 = vmul.f32 %v204, %v93
    %v206 = vmul.f32 %v205, %v204
    %v207 = vmul.f32 0.5, %v206
    %v208 = vsub.f32 1.5, %v207
    %v209 = vmul.f32 %v204, %v208
    %v210 = vmul.f32 %v93, %v209
    %vm211 = vcmp.eq.f32.partialorder %v93, inf
    %v212 = vsel %vm211, %v93, %v210
    %vm213 = vcmp.eq.f32.partialorder %v93, 0.0
    %v214 = vand.u32 %v93, 2147483648
    %v215 = vsel %vm213, %v214, %v212
    %v216 = vrsqrt.pop %v95
    %v217 = vmul.f32 %v216, %v95
    %v218 = vmul.f32 %v217, %v216
    %v219 = vmul.f32 0.5, %v218
    %v220 = vsub.f32 1.5, %v219
    %v221 = vmul.f32 %v216, %v220
    %v222 = vmul.f32 %v95, %v221
    %vm223 = vcmp.eq.f32.partialorder %v95, inf
    %v224 = vsel %vm223, %v95, %v222
    %vm225 = vcmp.eq.f32.partialorder %v95, 0.0
    %v226 = vand.u32 %v95, 2147483648
    %v227 = vsel %vm225, %v226, %v224
    %v228 = vrsqrt.pop %v97
    %v229 = vmul.f32 %v228, %v97
    %v230 = vmul.f32 %v229, %v228
    %v231 = vmul.f32 0.5, %v230
    %v232 = vsub.f32 1.5, %v231
    %v233 = vmul.f32 %v228, %v232
    %v234 = vmul.f32 %v97, %v233
    %vm235 = vcmp.eq.f32.partialorder %v97, inf
    %v236 = vsel %vm235, %v97, %v234
    %vm237 = vcmp.eq.f32.partialorder %v97, 0.0
    %v238 = vand.u32 %v97, 2147483648
    %v239 = vsel %vm237, %v238, %v236
    %v240 = vrsqrt.pop %v99
    %v241 = vmul.f32 %v240, %v99
    %v242 = vmul.f32 %v241, %v240
    %v243 = vmul.f32 0.5, %v242
    %v244 = vsub.f32 1.5, %v243
    %v245 = vmul.f32 %v240, %v244
    %v246 = vmul.f32 %v99, %v245
    %vm247 = vcmp.eq.f32.partialorder %v99, inf
    %v248 = vsel %vm247, %v99, %v246
    %vm249 = vcmp.eq.f32.partialorder %v99, 0.0
    %v250 = vand.u32 %v99, 2147483648
    %v251 = vsel %vm249, %v250, %v248
    %v252 = vrsqrt.pop %v101
    %v253 = vmul.f32 %v252, %v101
    %v254 = vmul.f32 %v253, %v252
    %v255 = vmul.f32 0.5, %v254
    %v256 = vsub.f32 1.5, %v255
    %v257 = vmul.f32 %v252, %v256
    %v258 = vmul.f32 %v101, %v257
    %vm259 = vcmp.eq.f32.partialorder %v101, inf
    %v260 = vsel %vm259, %v101, %v258
    %vm261 = vcmp.eq.f32.partialorder %v101, 0.0
    %v262 = vand.u32 %v101, 2147483648
    %v263 = vsel %vm261, %v262, %v260
    %v264 = vrsqrt.pop %v103
    %v265 = vmul.f32 %v264, %v103
    %v266 = vmul.f32 %v265, %v264
    %v267 = vmul.f32 0.5, %v266
    %v268 = vsub.f32 1.5, %v267
    %v269 = vmul.f32 %v264, %v268
    %v270 = vmul.f32 %v103, %v269
    %vm271 = vcmp.eq.f32.partialorder %v103, inf
    %v272 = vsel %vm271, %v103, %v270
    %vm273 = vcmp.eq.f32.partialorder %v103, 0.0
    %v274 = vand.u32 %v103, 2147483648
    %v275 = vsel %vm273, %v274, %v272
    %v276 = vrsqrt.pop %v105
    %v277 = vmul.f32 %v276, %v105
    %v278 = vmul.f32 %v277, %v276
    %v279 = vmul.f32 0.5, %v278
    %v280 = vsub.f32 1.5, %v279
    %v281 = vmul.f32 %v276, %v280
    %v282 = vmul.f32 %v105, %v281
    %vm283 = vcmp.eq.f32.partialorder %v105, inf
    %v284 = vsel %vm283, %v105, %v282
    %vm285 = vcmp.eq.f32.partialorder %v105, 0.0
    %v286 = vand.u32 %v105, 2147483648
    %v287 = vsel %vm285, %v286, %v284
    %v288 = vrsqrt.pop %v107
    %v289 = vmul.f32 %v288, %v107
    %v290 = vmul.f32 %v289, %v288
    %v291 = vmul.f32 0.5, %v290
    %v292 = vsub.f32 1.5, %v291
    %v293 = vmul.f32 %v288, %v292
    %v294 = vmul.f32 %v107, %v293
    %vm295 = vcmp.eq.f32.partialorder %v107, inf
    %v296 = vsel %vm295, %v107, %v294
    %vm297 = vcmp.eq.f32.partialorder %v107, 0.0
    %v298 = vand.u32 %v107, 2147483648
    %v299 = vsel %vm297, %v298, %v296
    %v300 = vadd.f32 %v119, 1e-08
    %v301 = vadd.f32 %v131, 1e-08
    %v302 = vadd.f32 %v143, 1e-08
    %v303 = vadd.f32 %v155, 1e-08
    %v304 = vadd.f32 %v167, 1e-08
    %v305 = vadd.f32 %v179, 1e-08
    %v306 = vadd.f32 %v191, 1e-08
    %v307 = vadd.f32 %v203, 1e-08
    %v308 = vadd.f32 %v215, 1e-08
    %v309 = vadd.f32 %v227, 1e-08
    %v310 = vadd.f32 %v239, 1e-08
    %v311 = vadd.f32 %v251, 1e-08
    %v312 = vadd.f32 %v263, 1e-08
    %v313 = vadd.f32 %v275, 1e-08
    %v314 = vadd.f32 %v287, 1e-08
    %v315 = vadd.f32 %v299, 1e-08
    %v316 = vrcp.pop %v300
    %v317 = vmul.f32 %v300, %v316
    %v318 = vsub.f32 1.0, %v317
    %v319 = vmul.f32 %v316, %v318
    %v320 = vadd.f32 %v316, %v319
    %vm321 = vweird.f32 %v300
    %vm322 = vweird.f32 %v316
    %vm323 = vmor %vm321, %vm322
    %v324 = vsel %vm323, %v316, %v320
    %v325 = vand.u32 2147483647, %v300
    %vm326 = vcmp.eq.f32.partialorder %v325, 8.507059e+37
    %v327 = vand.u32 %v300, 2147483648
    %v328 = vor.u32 1.1754944e-38, %v327
    %v329 = vsel %vm326, %v328, %v324
    %v330 = vmul.f32 %v44, %v329
    %v331 = vrcp.pop %v301
    %v332 = vmul.f32 %v301, %v331
    %v333 = vsub.f32 1.0, %v332
    %v334 = vmul.f32 %v331, %v333
    %v335 = vadd.f32 %v331, %v334
    %vm336 = vweird.f32 %v301
    %vm337 = vweird.f32 %v331
    %vm338 = vmor %vm336, %vm337
    %v339 = vsel %vm338, %v331, %v335
    %v340 = vand.u32 2147483647, %v301
    %vm341 = vcmp.eq.f32.partialorder %v340, 8.507059e+37
    %v342 = vand.u32 %v301, 2147483648
    %v343 = vor.u32 1.1754944e-38, %v342
    %v344 = vsel %vm341, %v343, %v339
    %v345 = vmul.f32 %v45, %v344
    %v346 = vrcp.pop %v302
    %v347 = vmul.f32 %v302, %v346
    %v348 = vsub.f32 1.0, %v347
    %v349 = vmul.f32 %v346, %v348
    %v350 = vadd.f32 %v346, %v349
    %vm351 = vweird.f32 %v302
    %vm352 = vweird.f32 %v346
    %vm353 = vmor %vm351, %vm352
    %v354 = vsel %vm353, %v346, %v350
    %v355 = vand.u32 2147483647, %v302
    %vm356 = vcmp.eq.f32.partialorder %v355, 8.507059e+37
    %v357 = vand.u32 %v302, 2147483648
    %v358 = vor.u32 1.1754944e-38, %v357
    %v359 = vsel %vm356, %v358, %v354
    %v360 = vmul.f32 %v46, %v359
    %v361 = vrcp.pop %v303
    %v362 = vmul.f32 %v303, %v361
    %v363 = vsub.f32 1.0, %v362
    %v364 = vmul.f32 %v361, %v363
    %v365 = vadd.f32 %v361, %v364
    %vm366 = vweird.f32 %v303
    %vm367 = vweird.f32 %v361
    %vm368 = vmor %vm366, %vm367
    %v369 = vsel %vm368, %v361, %v365
    %v370 = vand.u32 2147483647, %v303
    %vm371 = vcmp.eq.f32.partialorder %v370, 8.507059e+37
    %v372 = vand.u32 %v303, 2147483648
    %v373 = vor.u32 1.1754944e-38, %v372
    %v374 = vsel %vm371, %v373, %v369
    %v375 = vmul.f32 %v47, %v374
    %v376 = vrcp.pop %v304
    %v377 = vmul.f32 %v304, %v376
    %v378 = vsub.f32 1.0, %v377
    %v379 = vmul.f32 %v376, %v378
    %v380 = vadd.f32 %v376, %v379
    %vm381 = vweird.f32 %v304
    %vm382 = vweird.f32 %v376
    %vm383 = vmor %vm381, %vm382
    %v384 = vsel %vm383, %v376, %v380
    %v385 = vand.u32 2147483647, %v304
    %vm386 = vcmp.eq.f32.partialorder %v385, 8.507059e+37
    %v387 = vand.u32 %v304, 2147483648
    %v388 = vor.u32 1.1754944e-38, %v387
    %v389 = vsel %vm386, %v388, %v384
    %v390 = vmul.f32 %v48, %v389
    %v391 = vrcp.pop %v305
    %v392 = vmul.f32 %v305, %v391
    %v393 = vsub.f32 1.0, %v392
    %v394 = vmul.f32 %v391, %v393
    %v395 = vadd.f32 %v391, %v394
    %vm396 = vweird.f32 %v305
    %vm397 = vweird.f32 %v391
    %vm398 = vmor %vm396, %vm397
    %v399 = vsel %vm398, %v391, %v395
    %v400 = vand.u32 2147483647, %v305
    %vm401 = vcmp.eq.f32.partialorder %v400, 8.507059e+37
    %v402 = vand.u32 %v305, 2147483648
    %v403 = vor.u32 1.1754944e-38, %v402
    %v404 = vsel %vm401, %v403, %v399
    %v405 = vmul.f32 %v49, %v404
    %v406 = vrcp.pop %v306
    %v407 = vmul.f32 %v306, %v406
    %v408 = vsub.f32 1.0, %v407
    %v409 = vmul.f32 %v406, %v408
    %v410 = vadd.f32 %v406, %v409
    %vm411 = vweird.f32 %v306
    %vm412 = vweird.f32 %v406
    %vm413 = vmor %vm411, %vm412
    %v414 = vsel %vm413, %v406, %v410
    %v415 = vand.u32 2147483647, %v306
    %vm416 = vcmp.eq.f32.partialorder %v415, 8.507059e+37
    %v417 = vand.u32 %v306, 2147483648
    %v418 = vor.u32 1.1754944e-38, %v417
    %v419 = vsel %vm416, %v418, %v414
    %v420 = vmul.f32 %v50, %v419
    %v421 = vrcp.pop %v307
    %v422 = vmul.f32 %v307, %v421
    %v423 = vsub.f32 1.0, %v422
    %v424 = vmul.f32 %v421, %v423
    %v425 = vadd.f32 %v421, %v424
    %vm426 = vweird.f32 %v307
    %vm427 = vweird.f32 %v421
    %vm428 = vmor %vm426, %vm427
    %v429 = vsel %vm428, %v421, %v425
    %v430 = vand.u32 2147483647, %v307
    %vm431 = vcmp.eq.f32.partialorder %v430, 8.507059e+37
    %v432 = vand.u32 %v307, 2147483648
    %v433 = vor.u32 1.1754944e-38, %v432
    %v434 = vsel %vm431, %v433, %v429
    %v435 = vmul.f32 %v51, %v434
    %v436 = vrcp.pop %v308
    %v437 = vmul.f32 %v308, %v436
    %v438 = vsub.f32 1.0, %v437
    %v439 = vmul.f32 %v436, %v438
    %v440 = vadd.f32 %v436, %v439
    %vm441 = vweird.f32 %v308
    %vm442 = vweird.f32 %v436
    %vm443 = vmor %vm441, %vm442
    %v444 = vsel %vm443, %v436, %v440
    %v445 = vand.u32 2147483647, %v308
    %vm446 = vcmp.eq.f32.partialorder %v445, 8.507059e+37
    %v447 = vand.u32 %v308, 2147483648
    %v448 = vor.u32 1.1754944e-38, %v447
    %v449 = vsel %vm446, %v448, %v444
    %v450 = vmul.f32 %v52, %v449
    %v451 = vrcp.pop %v309
    %v452 = vmul.f32 %v309, %v451
    %v453 = vsub.f32 1.0, %v452
    %v454 = vmul.f32 %v451, %v453
    %v455 = vadd.f32 %v451, %v454
    %vm456 = vweird.f32 %v309
    %vm457 = vweird.f32 %v451
    %vm458 = vmor %vm456, %vm457
    %v459 = vsel %vm458, %v451, %v455
    %v460 = vand.u32 2147483647, %v309
    %vm461 = vcmp.eq.f32.partialorder %v460, 8.507059e+37
    %v462 = vand.u32 %v309, 2147483648
    %v463 = vor.u32 1.1754944e-38, %v462
    %v464 = vsel %vm461, %v463, %v459
    %v465 = vmul.f32 %v53, %v464
    %v466 = vrcp.pop %v310
    %v467 = vmul.f32 %v310, %v466
    %v468 = vsub.f32 1.0, %v467
    %v469 = vmul.f32 %v466, %v468
    %v470 = vadd.f32 %v466, %v469
    %vm471 = vweird.f32 %v310
    %vm472 = vweird.f32 %v466
    %vm473 = vmor %vm471, %vm472
    %v474 = vsel %vm473, %v466, %v470
    %v475 = vand.u32 2147483647, %v310
    %vm476 = vcmp.eq.f32.partialorder %v475, 8.507059e+37
    %v477 = vand.u32 %v310, 2147483648
    %v478 = vor.u32 1.1754944e-38, %v477
    %v479 = vsel %vm476, %v478, %v474
    %v480 = vmul.f32 %v54, %v479
    %v481 = vrcp.pop %v311
    %v482 = vmul.f32 %v311, %v481
    %v483 = vsub.f32 1.0, %v482
    %v484 = vmul.f32 %v481, %v483
    %v485 = vadd.f32 %v481, %v484
    %vm486 = vweird.f32 %v311
    %vm487 = vweird.f32 %v481
    %vm488 = vmor %vm486, %vm487
    %v489 = vsel %vm488, %v481, %v485
    %v490 = vand.u32 2147483647, %v311
    %vm491 = vcmp.eq.f32.partialorder %v490, 8.507059e+37
    %v492 = vand.u32 %v311, 2147483648
    %v493 = vor.u32 1.1754944e-38, %v492
    %v494 = vsel %vm491, %v493, %v489
    %v495 = vmul.f32 %v55, %v494
    %v496 = vrcp.pop %v312
    %v497 = vmul.f32 %v312, %v496
    %v498 = vsub.f32 1.0, %v497
    %v499 = vmul.f32 %v496, %v498
    %v500 = vadd.f32 %v496, %v499
    %vm501 = vweird.f32 %v312
    %vm502 = vweird.f32 %v496
    %vm503 = vmor %vm501, %vm502
    %v504 = vsel %vm503, %v496, %v500
    %v505 = vand.u32 2147483647, %v312
    %vm506 = vcmp.eq.f32.partialorder %v505, 8.507059e+37
    %v507 = vand.u32 %v312, 2147483648
    %v508 = vor.u32 1.1754944e-38, %v507
    %v509 = vsel %vm506, %v508, %v504
    %v510 = vmul.f32 %v56, %v509
    %v511 = vrcp.pop %v313
    %v512 = vmul.f32 %v313, %v511
    %v513 = vsub.f32 1.0, %v512
    %v514 = vmul.f32 %v511, %v513
    %v515 = vadd.f32 %v511, %v514
    %vm516 = vweird.f32 %v313
    %vm517 = vweird.f32 %v511
    %vm518 = vmor %vm516, %vm517
    %v519 = vsel %vm518, %v511, %v515
    %v520 = vand.u32 2147483647, %v313
    %vm521 = vcmp.eq.f32.partialorder %v520, 8.507059e+37
    %v522 = vand.u32 %v313, 2147483648
    %v523 = vor.u32 1.1754944e-38, %v522
    %v524 = vsel %vm521, %v523, %v519
    %v525 = vmul.f32 %v57, %v524
    %v526 = vrcp.pop %v314
    %v527 = vmul.f32 %v314, %v526
    %v528 = vsub.f32 1.0, %v527
    %v529 = vmul.f32 %v526, %v528
    %v530 = vadd.f32 %v526, %v529
    %vm531 = vweird.f32 %v314
    %vm532 = vweird.f32 %v526
    %vm533 = vmor %vm531, %vm532
    %v534 = vsel %vm533, %v526, %v530
    %v535 = vand.u32 2147483647, %v314
    %vm536 = vcmp.eq.f32.partialorder %v535, 8.507059e+37
    %v537 = vand.u32 %v314, 2147483648
    %v538 = vor.u32 1.1754944e-38, %v537
    %v539 = vsel %vm536, %v538, %v534
    %v540 = vmul.f32 %v58, %v539
    %v541 = vrcp.pop %v315
    %v542 = vmul.f32 %v315, %v541
    %v543 = vsub.f32 1.0, %v542
    %v544 = vmul.f32 %v541, %v543
    %v545 = vadd.f32 %v541, %v544
    %vm546 = vweird.f32 %v315
    %vm547 = vweird.f32 %v541
    %vm548 = vmor %vm546, %vm547
    %v549 = vsel %vm548, %v541, %v545
    %v550 = vand.u32 2147483647, %v315
    %vm551 = vcmp.eq.f32.partialorder %v550, 8.507059e+37
    %v552 = vand.u32 %v315, 2147483648
    %v553 = vor.u32 1.1754944e-38, %v552
    %v554 = vsel %vm551, %v553, %v549
    %v555 = vmul.f32 %v59, %v554
    %v556 = vld [vmem:[#allocation5] sm:$0xff]
    %v557 = vld [vmem:[#allocation5 + $0x8] sm:$0xff]
    %v558 = vld [vmem:[#allocation5 + $0x10] sm:$0xff]
    %v559 = vld [vmem:[#allocation5 + $0x18] sm:$0xff]
    %v560 = vld [vmem:[#allocation5 + $0x20] sm:$0xff]
    %v561 = vld [vmem:[#allocation5 + $0x28] sm:$0xff]
    %v562 = vld [vmem:[#allocation5 + $0x30] sm:$0xff]
    %v563 = vld [vmem:[#allocation5 + $0x38] sm:$0xff]
    %v564 = vld [vmem:[#allocation5 + $0x40] sm:$0xff]
    %v565 = vld [vmem:[#allocation5 + $0x48] sm:$0xff]
    %v566 = vld [vmem:[#allocation5 + $0x50] sm:$0xff]
    %v567 = vld [vmem:[#allocation5 + $0x58] sm:$0xff]
    %v568 = vld [vmem:[#allocation5 + $0x60] sm:$0xff]
    %v569 = vld [vmem:[#allocation5 + $0x68] sm:$0xff]
    %v570 = vld [vmem:[#allocation5 + $0x70] sm:$0xff]
    %v571 = vld [vmem:[#allocation5 + $0x78] sm:$0xff]
    %v572 = vmul.f32 %v556, %v556
    %v573 = vmul.f32 %v557, %v557
    %v574 = vmul.f32 %v558, %v558
    %v575 = vmul.f32 %v559, %v559
    %v576 = vmul.f32 %v560, %v560
    %v577 = vmul.f32 %v561, %v561
    %v578 = vmul.f32 %v562, %v562
    %v579 = vmul.f32 %v563, %v563
    %v580 = vmul.f32 %v564, %v564
    %v581 = vmul.f32 %v565, %v565
    %v582 = vmul.f32 %v566, %v566
    %v583 = vmul.f32 %v567, %v567
    %v584 = vmul.f32 %v568, %v568
    %v585 = vmul.f32 %v569, %v569
    %v586 = vmul.f32 %v570, %v570
    %v587 = vmul.f32 %v571, %v571
    %588 = vadd.xlane.f32.xlu0 %v572
    %v589 = vpop.xlane.xlu0 %588
    %590 = vadd.xlane.f32.xlu0 %v573
    %v591 = vpop.xlane.xlu0 %590
    %592 = vadd.xlane.f32.xlu0 %v574
    %v593 = vpop.xlane.xlu0 %592
    %594 = vadd.xlane.f32.xlu0 %v575
    %v595 = vpop.xlane.xlu0 %594
    %596 = vadd.xlane.f32.xlu0 %v576
    %v597 = vpop.xlane.xlu0 %596
    %598 = vadd.xlane.f32.xlu0 %v577
    %v599 = vpop.xlane.xlu0 %598
    %600 = vadd.xlane.f32.xlu0 %v578
    %v601 = vpop.xlane.xlu0 %600
    %602 = vadd.xlane.f32.xlu0 %v579
    %v603 = vpop.xlane.xlu0 %602
    %604 = vadd.xlane.f32.xlu0 %v580
    %v605 = vpop.xlane.xlu0 %604
    %606 = vadd.xlane.f32.xlu0 %v581
    %v607 = vpop.xlane.xlu0 %606
    %608 = vadd.xlane.f32.xlu0 %v582
    %v609 = vpop.xlane.xlu0 %608
    %610 = vadd.xlane.f32.xlu0 %v583
    %v611 = vpop.xlane.xlu0 %610
    %612 = vadd.xlane.f32.xlu0 %v584
    %v613 = vpop.xlane.xlu0 %612
    %614 = vadd.xlane.f32.xlu0 %v585
    %v615 = vpop.xlane.xlu0 %614
    %616 = vadd.xlane.f32.xlu0 %v586
    %v617 = vpop.xlane.xlu0 %616
    %618 = vadd.xlane.f32.xlu0 %v587
    %v619 = vpop.xlane.xlu0 %618
    %v620 = vrsqrt.pop %v589
    %v621 = vmul.f32 %v620, %v589
    %v622 = vmul.f32 %v621, %v620
    %v623 = vmul.f32 0.5, %v622
    %v624 = vsub.f32 1.5, %v623
    %v625 = vmul.f32 %v620, %v624
    %v626 = vmul.f32 %v589, %v625
    %vm627 = vcmp.eq.f32.partialorder %v589, inf
    %v628 = vsel %vm627, %v589, %v626
    %vm629 = vcmp.eq.f32.partialorder %v589, 0.0
    %v630 = vand.u32 %v589, 2147483648
    %v631 = vsel %vm629, %v630, %v628
    %v632 = vrsqrt.pop %v591
    %v633 = vmul.f32 %v632, %v591
    %v634 = vmul.f32 %v633, %v632
    %v635 = vmul.f32 0.5, %v634
    %v636 = vsub.f32 1.5, %v635
    %v637 = vmul.f32 %v632, %v636
    %v638 = vmul.f32 %v591, %v637
    %vm639 = vcmp.eq.f32.partialorder %v591, inf
    %v640 = vsel %vm639, %v591, %v638
    %vm641 = vcmp.eq.f32.partialorder %v591, 0.0
    %v642 = vand.u32 %v591, 2147483648
    %v643 = vsel %vm641, %v642, %v640
    %v644 = vrsqrt.pop %v593
    %v645 = vmul.f32 %v644, %v593
    %v646 = vmul.f32 %v645, %v644
    %v647 = vmul.f32 0.5, %v646
    %v648 = vsub.f32 1.5, %v647
    %v649 = vmul.f32 %v644, %v648
    %v650 = vmul.f32 %v593, %v649
    %vm651 = vcmp.eq.f32.partialorder %v593, inf
    %v652 = vsel %vm651, %v593, %v650
    %vm653 = vcmp.eq.f32.partialorder %v593, 0.0
    %v654 = vand.u32 %v593, 2147483648
    %v655 = vsel %vm653, %v654, %v652
    %v656 = vrsqrt.pop %v595
    %v657 = vmul.f32 %v656, %v595
    %v658 = vmul.f32 %v657, %v656
    %v659 = vmul.f32 0.5, %v658
    %v660 = vsub.f32 1.5, %v659
    %v661 = vmul.f32 %v656, %v660
    %v662 = vmul.f32 %v595, %v661
    %vm663 = vcmp.eq.f32.partialorder %v595, inf
    %v664 = vsel %vm663, %v595, %v662
    %vm665 = vcmp.eq.f32.partialorder %v595, 0.0
    %v666 = vand.u32 %v595, 2147483648
    %v667 = vsel %vm665, %v666, %v664
    %v668 = vrsqrt.pop %v597
    %v669 = vmul.f32 %v668, %v597
    %v670 = vmul.f32 %v669, %v668
    %v671 = vmul.f32 0.5, %v670
    %v672 = vsub.f32 1.5, %v671
    %v673 = vmul.f32 %v668, %v672
    %v674 = vmul.f32 %v597, %v673
    %vm675 = vcmp.eq.f32.partialorder %v597, inf
    %v676 = vsel %vm675, %v597, %v674
    %vm677 = vcmp.eq.f32.partialorder %v597, 0.0
    %v678 = vand.u32 %v597, 2147483648
    %v679 = vsel %vm677, %v678, %v676
    %v680 = vrsqrt.pop %v599
    %v681 = vmul.f32 %v680, %v599
    %v682 = vmul.f32 %v681, %v680
    %v683 = vmul.f32 0.5, %v682
    %v684 = vsub.f32 1.5, %v683
    %v685 = vmul.f32 %v680, %v684
    %v686 = vmul.f32 %v599, %v685
    %vm687 = vcmp.eq.f32.partialorder %v599, inf
    %v688 = vsel %vm687, %v599, %v686
    %vm689 = vcmp.eq.f32.partialorder %v599, 0.0
    %v690 = vand.u32 %v599, 2147483648
    %v691 = vsel %vm689, %v690, %v688
    %v692 = vrsqrt.pop %v601
    %v693 = vmul.f32 %v692, %v601
    %v694 = vmul.f32 %v693, %v692
    %v695 = vmul.f32 0.5, %v694
    %v696 = vsub.f32 1.5, %v695
    %v697 = vmul.f32 %v692, %v696
    %v698 = vmul.f32 %v601, %v697
    %vm699 = vcmp.eq.f32.partialorder %v601, inf
    %v700 = vsel %vm699, %v601, %v698
    %vm701 = vcmp.eq.f32.partialorder %v601, 0.0
    %v702 = vand.u32 %v601, 2147483648
    %v703 = vsel %vm701, %v702, %v700
    %v704 = vrsqrt.pop %v603
    %v705 = vmul.f32 %v704, %v603
    %v706 = vmul.f32 %v705, %v704
    %v707 = vmul.f32 0.5, %v706
    %v708 = vsub.f32 1.5, %v707
    %v709 = vmul.f32 %v704, %v708
    %v710 = vmul.f32 %v603, %v709
    %vm711 = vcmp.eq.f32.partialorder %v603, inf
    %v712 = vsel %vm711, %v603, %v710
    %vm713 = vcmp.eq.f32.partialorder %v603, 0.0
    %v714 = vand.u32 %v603, 2147483648
    %v715 = vsel %vm713, %v714, %v712
    %v716 = vrsqrt.pop %v605
    %v717 = vmul.f32 %v716, %v605
    %v718 = vmul.f32 %v717, %v716
    %v719 = vmul.f32 0.5, %v718
    %v720 = vsub.f32 1.5, %v719
    %v721 = vmul.f32 %v716, %v720
    %v722 = vmul.f32 %v605, %v721
    %vm723 = vcmp.eq.f32.partialorder %v605, inf
    %v724 = vsel %vm723, %v605, %v722
    %vm725 = vcmp.eq.f32.partialorder %v605, 0.0
    %v726 = vand.u32 %v605, 2147483648
    %v727 = vsel %vm725, %v726, %v724
    %v728 = vrsqrt.pop %v607
    %v729 = vmul.f32 %v728, %v607
    %v730 = vmul.f32 %v729, %v728
    %v731 = vmul.f32 0.5, %v730
    %v732 = vsub.f32 1.5, %v731
    %v733 = vmul.f32 %v728, %v732
    %v734 = vmul.f32 %v607, %v733
    %vm735 = vcmp.eq.f32.partialorder %v607, inf
    %v736 = vsel %vm735, %v607, %v734
    %vm737 = vcmp.eq.f32.partialorder %v607, 0.0
    %v738 = vand.u32 %v607, 2147483648
    %v739 = vsel %vm737, %v738, %v736
    %v740 = vrsqrt.pop %v609
    %v741 = vmul.f32 %v740, %v609
    %v742 = vmul.f32 %v741, %v740
    %v743 = vmul.f32 0.5, %v742
    %v744 = vsub.f32 1.5, %v743
    %v745 = vmul.f32 %v740, %v744
    %v746 = vmul.f32 %v609, %v745
    %vm747 = vcmp.eq.f32.partialorder %v609, inf
    %v748 = vsel %vm747, %v609, %v746
    %vm749 = vcmp.eq.f32.partialorder %v609, 0.0
    %v750 = vand.u32 %v609, 2147483648
    %v751 = vsel %vm749, %v750, %v748
    %v752 = vrsqrt.pop %v611
    %v753 = vmul.f32 %v752, %v611
    %v754 = vmul.f32 %v753, %v752
    %v755 = vmul.f32 0.5, %v754
    %v756 = vsub.f32 1.5, %v755
    %v757 = vmul.f32 %v752, %v756
    %v758 = vmul.f32 %v611, %v757
    %vm759 = vcmp.eq.f32.partialorder %v611, inf
    %v760 = vsel %vm759, %v611, %v758
    %vm761 = vcmp.eq.f32.partialorder %v611, 0.0
    %v762 = vand.u32 %v611, 2147483648
    %v763 = vsel %vm761, %v762, %v760
    %v764 = vrsqrt.pop %v613
    %v765 = vmul.f32 %v764, %v613
    %v766 = vmul.f32 %v765, %v764
    %v767 = vmul.f32 0.5, %v766
    %v768 = vsub.f32 1.5, %v767
    %v769 = vmul.f32 %v764, %v768
    %v770 = vmul.f32 %v613, %v769
    %vm771 = vcmp.eq.f32.partialorder %v613, inf
    %v772 = vsel %vm771, %v613, %v770
    %vm773 = vcmp.eq.f32.partialorder %v613, 0.0
    %v774 = vand.u32 %v613, 2147483648
    %v775 = vsel %vm773, %v774, %v772
    %v776 = vrsqrt.pop %v615
    %v777 = vmul.f32 %v776, %v615
    %v778 = vmul.f32 %v777, %v776
    %v779 = vmul.f32 0.5, %v778
    %v780 = vsub.f32 1.5, %v779
    %v781 = vmul.f32 %v776, %v780
    %v782 = vmul.f32 %v615, %v781
    %vm783 = vcmp.eq.f32.partialorder %v615, inf
    %v784 = vsel %vm783, %v615, %v782
    %vm785 = vcmp.eq.f32.partialorder %v615, 0.0
    %v786 = vand.u32 %v615, 2147483648
    %v787 = vsel %vm785, %v786, %v784
    %v788 = vrsqrt.pop %v617
    %v789 = vmul.f32 %v788, %v617
    %v790 = vmul.f32 %v789, %v788
    %v791 = vmul.f32 0.5, %v790
    %v792 = vsub.f32 1.5, %v791
    %v793 = vmul.f32 %v788, %v792
    %v794 = vmul.f32 %v617, %v793
    %vm795 = vcmp.eq.f32.partialorder %v617, inf
    %v796 = vsel %vm795, %v617, %v794
    %vm797 = vcmp.eq.f32.partialorder %v617, 0.0
    %v798 = vand.u32 %v617, 2147483648
    %v799 = vsel %vm797, %v798, %v796
    %v800 = vrsqrt.pop %v619
    %v801 = vmul.f32 %v800, %v619
    %v802 = vmul.f32 %v801, %v800
    %v803 = vmul.f32 0.5, %v802
    %v804 = vsub.f32 1.5, %v803
    %v805 = vmul.f32 %v800, %v804
    %v806 = vmul.f32 %v619, %v805
    %vm807 = vcmp.eq.f32.partialorder %v619, inf
    %v808 = vsel %vm807, %v619, %v806
    %vm809 = vcmp.eq.f32.partialorder %v619, 0.0
    %v810 = vand.u32 %v619, 2147483648
    %v811 = vsel %vm809, %v810, %v808
    %v812 = vadd.f32 %v631, 1e-08
    %v813 = vadd.f32 %v643, 1e-08
    %v814 = vadd.f32 %v655, 1e-08
    %v815 = vadd.f32 %v667, 1e-08
    %v816 = vadd.f32 %v679, 1e-08
    %v817 = vadd.f32 %v691, 1e-08
    %v818 = vadd.f32 %v703, 1e-08
    %v819 = vadd.f32 %v715, 1e-08
    %v820 = vadd.f32 %v727, 1e-08
    %v821 = vadd.f32 %v739, 1e-08
    %v822 = vadd.f32 %v751, 1e-08
    %v823 = vadd.f32 %v763, 1e-08
    %v824 = vadd.f32 %v775, 1e-08
    %v825 = vadd.f32 %v787, 1e-08
    %v826 = vadd.f32 %v799, 1e-08
    %v827 = vadd.f32 %v811, 1e-08
    %v828 = vrcp.pop %v812
    %v829 = vmul.f32 %v812, %v828
    %v830 = vsub.f32 1.0, %v829
    %v831 = vmul.f32 %v828, %v830
    %v832 = vadd.f32 %v828, %v831
    %vm833 = vweird.f32 %v812
    %vm834 = vweird.f32 %v828
    %vm835 = vmor %vm833, %vm834
    %v836 = vsel %vm835, %v828, %v832
    %v837 = vand.u32 2147483647, %v812
    %vm838 = vcmp.eq.f32.partialorder %v837, 8.507059e+37
    %v839 = vand.u32 %v812, 2147483648
    %v840 = vor.u32 1.1754944e-38, %v839
    %v841 = vsel %vm838, %v840, %v836
    %v842 = vmul.f32 %v556, %v841
    %v843 = vrcp.pop %v813
    %v844 = vmul.f32 %v813, %v843
    %v845 = vsub.f32 1.0, %v844
    %v846 = vmul.f32 %v843, %v845
    %v847 = vadd.f32 %v843, %v846
    %vm848 = vweird.f32 %v813
    %vm849 = vweird.f32 %v843
    %vm850 = vmor %vm848, %vm849
    %v851 = vsel %vm850, %v843, %v847
    %v852 = vand.u32 2147483647, %v813
    %vm853 = vcmp.eq.f32.partialorder %v852, 8.507059e+37
    %v854 = vand.u32 %v813, 2147483648
    %v855 = vor.u32 1.1754944e-38, %v854
    %v856 = vsel %vm853, %v855, %v851
    %v857 = vmul.f32 %v557, %v856
    %v858 = vrcp.pop %v814
    %v859 = vmul.f32 %v814, %v858
    %v860 = vsub.f32 1.0, %v859
    %v861 = vmul.f32 %v858, %v860
    %v862 = vadd.f32 %v858, %v861
    %vm863 = vweird.f32 %v814
    %vm864 = vweird.f32 %v858
    %vm865 = vmor %vm863, %vm864
    %v866 = vsel %vm865, %v858, %v862
    %v867 = vand.u32 2147483647, %v814
    %vm868 = vcmp.eq.f32.partialorder %v867, 8.507059e+37
    %v869 = vand.u32 %v814, 2147483648
    %v870 = vor.u32 1.1754944e-38, %v869
    %v871 = vsel %vm868, %v870, %v866
    %v872 = vmul.f32 %v558, %v871
    %v873 = vrcp.pop %v815
    %v874 = vmul.f32 %v815, %v873
    %v875 = vsub.f32 1.0, %v874
    %v876 = vmul.f32 %v873, %v875
    %v877 = vadd.f32 %v873, %v876
    %vm878 = vweird.f32 %v815
    %vm879 = vweird.f32 %v873
    %vm880 = vmor %vm878, %vm879
    %v881 = vsel %vm880, %v873, %v877
    %v882 = vand.u32 2147483647, %v815
    %vm883 = vcmp.eq.f32.partialorder %v882, 8.507059e+37
    %v884 = vand.u32 %v815, 2147483648
    %v885 = vor.u32 1.1754944e-38, %v884
    %v886 = vsel %vm883, %v885, %v881
    %v887 = vmul.f32 %v559, %v886
    %v888 = vrcp.pop %v816
    %v889 = vmul.f32 %v816, %v888
    %v890 = vsub.f32 1.0, %v889
    %v891 = vmul.f32 %v888, %v890
    %v892 = vadd.f32 %v888, %v891
    %vm893 = vweird.f32 %v816
    %vm894 = vweird.f32 %v888
    %vm895 = vmor %vm893, %vm894
    %v896 = vsel %vm895, %v888, %v892
    %v897 = vand.u32 2147483647, %v816
    %vm898 = vcmp.eq.f32.partialorder %v897, 8.507059e+37
    %v899 = vand.u32 %v816, 2147483648
    %v900 = vor.u32 1.1754944e-38, %v899
    %v901 = vsel %vm898, %v900, %v896
    %v902 = vmul.f32 %v560, %v901
    %v903 = vrcp.pop %v817
    %v904 = vmul.f32 %v817, %v903
    %v905 = vsub.f32 1.0, %v904
    %v906 = vmul.f32 %v903, %v905
    %v907 = vadd.f32 %v903, %v906
    %vm908 = vweird.f32 %v817
    %vm909 = vweird.f32 %v903
    %vm910 = vmor %vm908, %vm909
    %v911 = vsel %vm910, %v903, %v907
    %v912 = vand.u32 2147483647, %v817
    %vm913 = vcmp.eq.f32.partialorder %v912, 8.507059e+37
    %v914 = vand.u32 %v817, 2147483648
    %v915 = vor.u32 1.1754944e-38, %v914
    %v916 = vsel %vm913, %v915, %v911
    %v917 = vmul.f32 %v561, %v916
    %v918 = vrcp.pop %v818
    %v919 = vmul.f32 %v818, %v918
    %v920 = vsub.f32 1.0, %v919
    %v921 = vmul.f32 %v918, %v920
    %v922 = vadd.f32 %v918, %v921
    %vm923 = vweird.f32 %v818
    %vm924 = vweird.f32 %v918
    %vm925 = vmor %vm923, %vm924
    %v926 = vsel %vm925, %v918, %v922
    %v927 = vand.u32 2147483647, %v818
    %vm928 = vcmp.eq.f32.partialorder %v927, 8.507059e+37
    %v929 = vand.u32 %v818, 2147483648
    %v930 = vor.u32 1.1754944e-38, %v929
    %v931 = vsel %vm928, %v930, %v926
    %v932 = vmul.f32 %v562, %v931
    %v933 = vrcp.pop %v819
    %v934 = vmul.f32 %v819, %v933
    %v935 = vsub.f32 1.0, %v934
    %v936 = vmul.f32 %v933, %v935
    %v937 = vadd.f32 %v933, %v936
    %vm938 = vweird.f32 %v819
    %vm939 = vweird.f32 %v933
    %vm940 = vmor %vm938, %vm939
    %v941 = vsel %vm940, %v933, %v937
    %v942 = vand.u32 2147483647, %v819
    %vm943 = vcmp.eq.f32.partialorder %v942, 8.507059e+37
    %v944 = vand.u32 %v819, 2147483648
    %v945 = vor.u32 1.1754944e-38, %v944
    %v946 = vsel %vm943, %v945, %v941
    %v947 = vmul.f32 %v563, %v946
    %v948 = vrcp.pop %v820
    %v949 = vmul.f32 %v820, %v948
    %v950 = vsub.f32 1.0, %v949
    %v951 = vmul.f32 %v948, %v950
    %v952 = vadd.f32 %v948, %v951
    %vm953 = vweird.f32 %v820
    %vm954 = vweird.f32 %v948
    %vm955 = vmor %vm953, %vm954
    %v956 = vsel %vm955, %v948, %v952
    %v957 = vand.u32 2147483647, %v820
    %vm958 = vcmp.eq.f32.partialorder %v957, 8.507059e+37
    %v959 = vand.u32 %v820, 2147483648
    %v960 = vor.u32 1.1754944e-38, %v959
    %v961 = vsel %vm958, %v960, %v956
    %v962 = vmul.f32 %v564, %v961
    %v963 = vrcp.pop %v821
    %v964 = vmul.f32 %v821, %v963
    %v965 = vsub.f32 1.0, %v964
    %v966 = vmul.f32 %v963, %v965
    %v967 = vadd.f32 %v963, %v966
    %vm968 = vweird.f32 %v821
    %vm969 = vweird.f32 %v963
    %vm970 = vmor %vm968, %vm969
    %v971 = vsel %vm970, %v963, %v967
    %v972 = vand.u32 2147483647, %v821
    %vm973 = vcmp.eq.f32.partialorder %v972, 8.507059e+37
    %v974 = vand.u32 %v821, 2147483648
    %v975 = vor.u32 1.1754944e-38, %v974
    %v976 = vsel %vm973, %v975, %v971
    %v977 = vmul.f32 %v565, %v976
    %v978 = vrcp.pop %v822
    %v979 = vmul.f32 %v822, %v978
    %v980 = vsub.f32 1.0, %v979
    %v981 = vmul.f32 %v978, %v980
    %v982 = vadd.f32 %v978, %v981
    %vm983 = vweird.f32 %v822
    %vm984 = vweird.f32 %v978
    %vm985 = vmor %vm983, %vm984
    %v986 = vsel %vm985, %v978, %v982
    %v987 = vand.u32 2147483647, %v822
    %vm988 = vcmp.eq.f32.partialorder %v987, 8.507059e+37
    %v989 = vand.u32 %v822, 2147483648
    %v990 = vor.u32 1.1754944e-38, %v989
    %v991 = vsel %vm988, %v990, %v986
    %v992 = vmul.f32 %v566, %v991
    %v993 = vrcp.pop %v823
    %v994 = vmul.f32 %v823, %v993
    %v995 = vsub.f32 1.0, %v994
    %v996 = vmul.f32 %v993, %v995
    %v997 = vadd.f32 %v993, %v996
    %vm998 = vweird.f32 %v823
    %vm999 = vweird.f32 %v993
    %vm1000 = vmor %vm998, %vm999
    %v1001 = vsel %vm1000, %v993, %v997
    %v1002 = vand.u32 2147483647, %v823
    %vm1003 = vcmp.eq.f32.partialorder %v1002, 8.507059e+37
    %v1004 = vand.u32 %v823, 2147483648
    %v1005 = vor.u32 1.1754944e-38, %v1004
    %v1006 = vsel %vm1003, %v1005, %v1001
    %v1007 = vmul.f32 %v567, %v1006
    %v1008 = vrcp.pop %v824
    %v1009 = vmul.f32 %v824, %v1008
    %v1010 = vsub.f32 1.0, %v1009
    %v1011 = vmul.f32 %v1008, %v1010
    %v1012 = vadd.f32 %v1008, %v1011
    %vm1013 = vweird.f32 %v824
    %vm1014 = vweird.f32 %v1008
    %vm1015 = vmor %vm1013, %vm1014
    %v1016 = vsel %vm1015, %v1008, %v1012
    %v1017 = vand.u32 2147483647, %v824
    %vm1018 = vcmp.eq.f32.partialorder %v1017, 8.507059e+37
    %v1019 = vand.u32 %v824, 2147483648
    %v1020 = vor.u32 1.1754944e-38, %v1019
    %v1021 = vsel %vm1018, %v1020, %v1016
    %v1022 = vmul.f32 %v568, %v1021
    %v1023 = vrcp.pop %v825
    %v1024 = vmul.f32 %v825, %v1023
    %v1025 = vsub.f32 1.0, %v1024
    %v1026 = vmul.f32 %v1023, %v1025
    %v1027 = vadd.f32 %v1023, %v1026
    %vm1028 = vweird.f32 %v825
    %vm1029 = vweird.f32 %v1023
    %vm1030 = vmor %vm1028, %vm1029
    %v1031 = vsel %vm1030, %v1023, %v1027
    %v1032 = vand.u32 2147483647, %v825
    %vm1033 = vcmp.eq.f32.partialorder %v1032, 8.507059e+37
    %v1034 = vand.u32 %v825, 2147483648
    %v1035 = vor.u32 1.1754944e-38, %v1034
    %v1036 = vsel %vm1033, %v1035, %v1031
    %v1037 = vmul.f32 %v569, %v1036
    %v1038 = vrcp.pop %v826
    %v1039 = vmul.f32 %v826, %v1038
    %v1040 = vsub.f32 1.0, %v1039
    %v1041 = vmul.f32 %v1038, %v1040
    %v1042 = vadd.f32 %v1038, %v1041
    %vm1043 = vweird.f32 %v826
    %vm1044 = vweird.f32 %v1038
    %vm1045 = vmor %vm1043, %vm1044
    %v1046 = vsel %vm1045, %v1038, %v1042
    %v1047 = vand.u32 2147483647, %v826
    %vm1048 = vcmp.eq.f32.partialorder %v1047, 8.507059e+37
    %v1049 = vand.u32 %v826, 2147483648
    %v1050 = vor.u32 1.1754944e-38, %v1049
    %v1051 = vsel %vm1048, %v1050, %v1046
    %v1052 = vmul.f32 %v570, %v1051
    %v1053 = vrcp.pop %v827
    %v1054 = vmul.f32 %v827, %v1053
    %v1055 = vsub.f32 1.0, %v1054
    %v1056 = vmul.f32 %v1053, %v1055
    %v1057 = vadd.f32 %v1053, %v1056
    %vm1058 = vweird.f32 %v827
    %vm1059 = vweird.f32 %v1053
    %vm1060 = vmor %vm1058, %vm1059
    %v1061 = vsel %vm1060, %v1053, %v1057
    %v1062 = vand.u32 2147483647, %v827
    %vm1063 = vcmp.eq.f32.partialorder %v1062, 8.507059e+37
    %v1064 = vand.u32 %v827, 2147483648
    %v1065 = vor.u32 1.1754944e-38, %v1064
    %v1066 = vsel %vm1063, %v1065, %v1061
    %v1067 = vmul.f32 %v571, %v1066
    %1068 = vmatpush.xpose.msra.mxu0 %v1067
    %1069 = vmatpush.xpose.msra.mxu0 %v1052
    %1070 = vmatpush.xpose.msra.mxu0 %v1037
    %1071 = vmatpush.xpose.msra.mxu0 %v1022
    %1072 = vmatpush.xpose.msra.mxu0 %v1007
    %1073 = vmatpush.xpose.msra.mxu0 %v992
    %1074 = vmatpush.xpose.msra.mxu0 %v977
    %1075 = vmatpush.xpose.msra.mxu0 %v962
    %1076 = vmatpush.xpose.msra.mxu0 %v947
    %1077 = vmatpush.xpose.msra.mxu0 %v932
    %1078 = vmatpush.xpose.msra.mxu0 %v917
    %1079 = vmatpush.xpose.msra.mxu0 %v902
    %1080 = vmatpush.xpose.msra.mxu0 %v887
    %1081 = vmatpush.xpose.msra.mxu0 %v872
    %1082 = vmatpush.xpose.msra.mxu0 %v857
    %1083 = vmatpush.xpose.msra.mxu0 %v842
    %1084 = vmatmul.f32.gmra.mxu0 %v330
    %v1085 = vpop.f32.mrf.mxu0
    %v1086 = vadd.f32 0.0, %v1085
    %1087 = vmatmul.f32.gmra.mxu0 %v345
    %v1088 = vpop.f32.mrf.mxu0
    %v1089 = vadd.f32 0.0, %v1088
    %1090 = vmatmul.f32.gmra.mxu0 %v360
    %v1091 = vpop.f32.mrf.mxu0
    %v1092 = vadd.f32 0.0, %v1091
    %1093 = vmatmul.f32.gmra.mxu0 %v375
    %v1094 = vpop.f32.mrf.mxu0
    %v1095 = vadd.f32 0.0, %v1094
    %1096 = vmatmul.f32.gmra.mxu0 %v390
    %v1097 = vpop.f32.mrf.mxu0
    %v1098 = vadd.f32 0.0, %v1097
    %1099 = vmatmul.f32.gmra.mxu0 %v405
    %v1100 = vpop.f32.mrf.mxu0
    %v1101 = vadd.f32 0.0, %v1100
    %1102 = vmatmul.f32.gmra.mxu0 %v420
    %v1103 = vpop.f32.mrf.mxu0
    %v1104 = vadd.f32 0.0, %v1103
    %1105 = vmatmul.f32.gmra.mxu0 %v435
    %v1106 = vpop.f32.mrf.mxu0
    %v1107 = vadd.f32 0.0, %v1106
    %1108 = vmatmul.f32.gmra.mxu0 %v450
    %v1109 = vpop.f32.mrf.mxu0
    %v1110 = vadd.f32 0.0, %v1109
    %1111 = vmatmul.f32.gmra.mxu0 %v465
    %v1112 = vpop.f32.mrf.mxu0
    %v1113 = vadd.f32 0.0, %v1112
    %1114 = vmatmul.f32.gmra.mxu0 %v480
    %v1115 = vpop.f32.mrf.mxu0
    %v1116 = vadd.f32 0.0, %v1115
    %1117 = vmatmul.f32.gmra.mxu0 %v495
    %v1118 = vpop.f32.mrf.mxu0
    %v1119 = vadd.f32 0.0, %v1118
    %1120 = vmatmul.f32.gmra.mxu0 %v510
    %v1121 = vpop.f32.mrf.mxu0
    %v1122 = vadd.f32 0.0, %v1121
    %1123 = vmatmul.f32.gmra.mxu0 %v525
    %v1124 = vpop.f32.mrf.mxu0
    %v1125 = vadd.f32 0.0, %v1124
    %1126 = vmatmul.f32.gmra.mxu0 %v540
    %v1127 = vpop.f32.mrf.mxu0
    %v1128 = vadd.f32 0.0, %v1127
    %1129 = vmatmul.f32.gmra.mxu0 %v555
    %v1130 = vpop.f32.mrf.mxu0
    %v1131 = vadd.f32 0.0, %v1130
    %1132 = vdwg.mxu0
    %1133 = vst [vmem:[#allocation7] sm:$0xff] %v1086
    %1134 = vst [vmem:[#allocation7 + $0x8] sm:$0xff] %v1089
    %1135 = vst [vmem:[#allocation7 + $0x10] sm:$0xff] %v1092
    %1136 = vst [vmem:[#allocation7 + $0x18] sm:$0xff] %v1095
    %1137 = vst [vmem:[#allocation7 + $0x20] sm:$0xff] %v1098
    %1138 = vst [vmem:[#allocation7 + $0x28] sm:$0xff] %v1101
    %1139 = vst [vmem:[#allocation7 + $0x30] sm:$0xff] %v1104
    %1140 = vst [vmem:[#allocation7 + $0x38] sm:$0xff] %v1107
    %1141 = vst [vmem:[#allocation7 + $0x40] sm:$0xff] %v1110
    %1142 = vst [vmem:[#allocation7 + $0x48] sm:$0xff] %v1113
    %1143 = vst [vmem:[#allocation7 + $0x50] sm:$0xff] %v1116
    %1144 = vst [vmem:[#allocation7 + $0x58] sm:$0xff] %v1119
    %1145 = vst [vmem:[#allocation7 + $0x60] sm:$0xff] %v1122
    %1146 = vst [vmem:[#allocation7 + $0x68] sm:$0xff] %v1125
    %1147 = vst [vmem:[#allocation7 + $0x70] sm:$0xff] %v1128
    %1148 = vst [vmem:[#allocation7 + $0x78] sm:$0xff] %v1131
    // Predicated region
    $region18: #{tpu_custom_call.1} parent=1 // pred_check
      _
    $region19: #{tpu_custom_call.1} parent=1 // pred_check_branch
      %1150 = sbr.rel (0) target = $region21
    $region20: #{tpu_custom_call.1} parent=1 // pred_region
      %1152 = vsyncadd [#allocation4], 0
      %s1153 = sshll.u32 [#allocation7], 4
      %s1154 = int_to_ptr.vmem [resolvable:$true] %s1153
      %s1155 = sshll.u32 %s2, 4
      %s1156 = int_to_ptr.hbm [resolvable:$true] %s1155
      %1161 = dma.vmem_to_hbm [thread:$0]  %s1154, 2048, %s1156, [#allocation4], 128, 128, 8
    $region21: #{tpu_custom_call.1} parent=1 // pred_fallthru
      _
    // Predicated region
    $region22: #{tpu_custom_call.1} parent=1 // pred_check
      _
    $region23: #{tpu_custom_call.1} parent=1 // pred_check_branch
      %1163 = sbr.rel (0) target = $region25
    $region24: #{tpu_custom_call.1} parent=1 // pred_region
      %1165 = dma.done [#allocation4], 2048
    $region25: #{tpu_custom_call.1} parent=1 // pred_fallthru
      _
    %1166 = vsyncpa [#allocation3], 1
    %1167 = vsyncpa [#allocation6], 1
    %1168 = vsyncpa [#allocation4], 1

</llo_original>
